<compile_context>
chip_gen: v6e
topology: v6e:2x2x1
jax: 0.10.0
libtpu: 0.0.40
codegen_flags: <defaults>
</compile_context>

<pallas_src>
import jax
import jax.numpy as jnp
from jax.experimental import pallas as pl
from jax.experimental.pallas import tpu as pltpu


# ----------------------------------------------------------------------------
# helpers
# ----------------------------------------------------------------------------
def _round_up(x, m):
    return (x + m - 1) // m * m


def _num_tensorcores_per_chip():
    """2 TensorCores share the 'parallel' grid axis on v7x-class chips."""
    try:
        kind = jax.devices()[0].device_kind.lower()
    except Exception:
        return 1
    return 2 if "7" in kind else 1


def _pick_rows_tiling(M):
    """Column tiling over the B*T axis (which lives on lanes).

    TM is a multiple of 128 (lane-dense blocks). Tiny workloads run as a
    single grid step (no per-step overhead on single-TC v5e/v6e); on 2-TC
    chips an even, balanced tile count is preferred; TM is capped at 512.
    """
    Mp = _round_up(M, 128)
    if Mp <= 512:
        return Mp, Mp
    ntc = _num_tensorcores_per_chip()
    for tm in (512, 384, 256, 128):
        n = pl.cdiv(Mp, tm)
        if ntc == 2 and n % 2 == 1:
            continue
        return tm * n, tm
    tm = 512
    n = pl.cdiv(Mp, tm)
    return tm * n, tm


# Ordered names of the packed weight operands fed to the fused kernel.
_PACKED_WEIGHTS = ("enc_w", "enc_b", "b1_w", "b1_b", "b2_w", "b2_b",
                   "b3_w", "b3_b", "g_w", "g_b")


# ----------------------------------------------------------------------------
# Pallas kernel: whole per-timestep pipeline, feature-major layout
# ----------------------------------------------------------------------------
def _batfd_fused_kernel(x_ref, enc_w, enc_b, b1_w, b1_b, b2_w, b2_b,
                        b3_w, b3_b, g_w, g_b, o_ref):
    """One (., TM) column tile of B*T timesteps; features on sublanes,
    timesteps on lanes.  encoder proj -> (frame-classifier folded) ->
    boundary MLP (v|a packed) -> fusion gate -> gated fusion column 0.
    MXU operands bf16, f32 accumulation; output block is lane-dense (1, TM).
    """
    def mm(w_ref, x):
        return jnp.dot(w_ref[...], x, preferred_element_type=jnp.float32)

    h = jnp.maximum(mm(enc_w, x_ref[...]) + enc_b[...], 0.0)          # (2C, TM) f32
    hb = h.astype(jnp.bfloat16)
    z1 = jnp.maximum(mm(b1_w, hb) + b1_b[...], 0.0).astype(jnp.bfloat16)   # (2h0, TM)
    z2 = jnp.maximum(mm(b2_w, z1) + b2_b[...], 0.0).astype(jnp.bfloat16)   # (2h1, TM)

    # column 0 of the v/a boundary maps (rows 0,1 valid; rest is padding)
    bm = jax.nn.sigmoid(mm(b3_w, z2) + b3_b[...])                     # (8, TM)
    # fusion attention gate, column 0 (row 0 valid)
    gate = jax.nn.sigmoid(mm(g_w, hb) + g_b[...])                     # (8, TM)

    g0 = gate[0:1, :]
    fused = g0 * bm[0:1, :] + (1.0 - g0) * bm[1:2, :]                 # (1, TM)
    o_ref[...] = fused.astype(o_ref.dtype)


def batfd_fusion_col0(x_t, kp):
    """x_t: (Kin, M) bf16 feature-major rows -> fusion_bm_map[:, 0, :] flat (M,)."""
    Kin, M = x_t.shape
    Mp, TM = _pick_rows_tiling(M)
    if Mp != M:
        x_t = jnp.pad(x_t, ((0, 0), (0, Mp - M)))

    weights = [kp[name] for name in _PACKED_WEIGHTS]
    w_specs = [pl.BlockSpec(w.shape, lambda i: (0, 0)) for w in weights]

    out = pl.pallas_call(
        _batfd_fused_kernel,
        out_shape=jax.ShapeDtypeStruct((1, Mp), jnp.float32),
        grid_spec=pltpu.PrefetchScalarGridSpec(
            num_scalar_prefetch=0,
            grid=(Mp // TM,),
            in_specs=[pl.BlockSpec((Kin, TM), lambda i: (0, i))] + w_specs,
            out_specs=pl.BlockSpec((1, TM), lambda i: (0, i)),
        ),
        compiler_params=pltpu.CompilerParams(
            dimension_semantics=("parallel",)),
    )(x_t, *weights)
    return out[0, :M]


# ----------------------------------------------------------------------------
# Parameter initialization (mirrors module init) + kernel-ready packing
# ----------------------------------------------------------------------------
def _linear_init(key, k_in, n_out, std=0.01):
    # nn.Linear branch of _initialize_weights: normal(0, 0.01), bias 0
    w = std * jax.random.normal(key, (k_in, n_out), jnp.float32)
    b = jnp.zeros((n_out,), jnp.float32)
    return w, b


def _conv1x1_init(key, c_in, c_out):
    # kaiming-normal fan_out (relu): std = sqrt(2 / fan_out), bias 0
    std = jnp.sqrt(2.0 / c_out)
    w = std * jax.random.normal(key, (c_in, c_out), jnp.float32)
    b = jnp.zeros((c_out,), jnp.float32)
    return w, b


def init_params(key, *, mel, cla_feat, temporal_dim, max_duration, bm_feats):
    keys = jax.random.split(key, 16)
    C, T, D = cla_feat, temporal_dim, max_duration
    h0, h1 = bm_feats
    p = {}
    p["ve_w"], p["ve_b"] = _conv1x1_init(keys[0], 3, C)          # video encoder proj
    p["ae_w"], p["ae_b"] = _conv1x1_init(keys[1], mel, C)        # audio encoder proj
    p["vfc_w"], p["vfc_b"] = _conv1x1_init(keys[2], C, 1)        # video frame classifier
    p["afc_w"], p["afc_b"] = _conv1x1_init(keys[3], C, 1)        # audio frame classifier
    # boundary modules (video / audio): (C+1) -> h0 -> h1 -> D
    p["vbm1_w"], p["vbm1_b"] = _conv1x1_init(keys[4], C + 1, h0)
    p["vbm2_w"], p["vbm2_b"] = _conv1x1_init(keys[5], h0, h1)
    p["vbm3_w"], p["vbm3_b"] = _conv1x1_init(keys[6], h1, D)
    p["abm1_w"], p["abm1_b"] = _conv1x1_init(keys[7], C + 1, h0)
    p["abm2_w"], p["abm2_b"] = _conv1x1_init(keys[8], h0, h1)
    p["abm3_w"], p["abm3_b"] = _conv1x1_init(keys[9], h1, D)
    # fusion attention gate: concat(v_bm_in, a_bm_in) -> D, sigmoid
    p["fuse_w"], p["fuse_b"] = _conv1x1_init(keys[10], 2 * (C + 1), D)
    # classifier MLP on fusion_bm_map[:, 0, :]  (embed == temporal_dim)
    p["cls1_w"], p["cls1_b"] = _linear_init(keys[11], T, T)
    p["cls2_w"], p["cls2_b"] = _linear_init(keys[12], T, 1)
    return p


def prepare_params(raw, *, cla_feat):
    """Compile-time packing for the fused kernel:
       * fold the N=1 frame-classifier heads into bm1 / fusion-gate weights,
       * block-diagonally pack the video/audio streams (one matmul per layer),
       * keep only column 0 of bm3/fusion (forward consumes fusion[:, 0, :]),
       * transpose to feature-major orientation; bf16 weights, f32 (F,1) biases.
    """
    C = cla_feat
    f32 = jnp.float32

    def block_diag(a, b):
        a = jnp.asarray(a, f32)
        b = jnp.asarray(b, f32)
        return jnp.block([[a, jnp.zeros((a.shape[0], b.shape[1]), f32)],
                          [jnp.zeros((b.shape[0], a.shape[1]), f32), b]])

    def fold(bm_w, bm_b, fc_w, fc_b):
        # consumer of concat([feat, feat @ fc_w + fc_b]) == feat @ w_eff + b_eff
        w_eff = bm_w[:C] + fc_w @ bm_w[C:C + 1]
        b_eff = bm_b + fc_b[0] * bm_w[C]
        return w_eff, b_eff

    def pad8(x):  # pad sublane (first) dim to a multiple of 8
        r = x.shape[0] % 8
        return x if r == 0 else jnp.pad(x, ((0, 8 - r), (0, 0)))

    wT = lambda w: jnp.asarray(w, f32).T.astype(jnp.bfloat16)   # (in,out) -> (out,in)
    col = lambda b: jnp.asarray(b, f32).reshape(-1, 1)          # bias as (F, 1)

    # encoder 1x1 projections, packed
    enc_w = block_diag(raw["ve_w"], raw["ae_w"])                 # (Kv+Ka, 2C)
    enc_b = jnp.concatenate([raw["ve_b"], raw["ae_b"]])          # (2C,)

    # boundary layer 1 with frame-classifier column folded in, packed
    vb1_w, vb1_b = fold(raw["vbm1_w"], raw["vbm1_b"], raw["vfc_w"], raw["vfc_b"])
    ab1_w, ab1_b = fold(raw["abm1_w"], raw["abm1_b"], raw["afc_w"], raw["afc_b"])
    b1_w = block_diag(vb1_w, ab1_w)                              # (2C, 2h0)
    b1_b = jnp.concatenate([vb1_b, ab1_b])                       # (2h0,)

    b2_w = block_diag(raw["vbm2_w"], raw["abm2_w"])              # (2h0, 2h1)
    b2_b = jnp.concatenate([raw["vbm2_b"], raw["abm2_b"]])       # (2h1,)

    # boundary layer 3, column 0 only
    b3_w = block_diag(raw["vbm3_w"][:, :1], raw["abm3_w"][:, :1])  # (2h1, 2)
    b3_b = jnp.stack([raw["vbm3_b"][0], raw["abm3_b"][0]])         # (2,)

    # fusion attention gate, column 0, with frame-classifier columns folded in
    fw_v = raw["fuse_w"][:C + 1, 0]
    fw_a = raw["fuse_w"][C + 1:, 0]
    gv = fw_v[:C] + raw["vfc_w"][:, 0] * fw_v[C]
    ga = fw_a[:C] + raw["afc_w"][:, 0] * fw_a[C]
    g_w = jnp.concatenate([gv, ga]).reshape(-1, 1)               # (2C, 1)
    g_b = (raw["fuse_b"][0] + raw["vfc_b"][0] * fw_v[C]
           + raw["afc_b"][0] * fw_a[C]).reshape(1)               # (1,)

    return {
        "enc_w": wT(enc_w), "enc_b": col(enc_b),
        "b1_w": wT(b1_w), "b1_b": col(b1_b),
        "b2_w": wT(b2_w), "b2_b": col(b2_b),
        "b3_w": pad8(wT(b3_w)), "b3_b": pad8(col(b3_b)),
        "g_w": pad8(wT(g_w)), "g_b": pad8(col(g_b)),
        # classifier head stays f32 and runs in plain XLA (tiny)
        "cls1_w": jnp.asarray(raw["cls1_w"], f32), "cls1_b": jnp.asarray(raw["cls1_b"], f32),
        "cls2_w": jnp.asarray(raw["cls2_w"], f32), "cls2_b": jnp.asarray(raw["cls2_b"], f32),
    }


# ----------------------------------------------------------------------------
# Forward pass
# ----------------------------------------------------------------------------
def batfd_forward(params, video, audio):
    B, _, T, H, W = video.shape
    MEL = audio.shape[1]
    M = B * T

    # --- encoders (stand-in) -------------------------------------------
    # TODO(synk): original C3D / CNN encoders not provided; bf16 spatial
    # mean-pool + 1x1 projection (inside the fused kernel) used as stand-in.
    v_pool = jnp.mean(video.astype(jnp.bfloat16), axis=(3, 4))       # (B, 3, T)
    v_t = v_pool.transpose(1, 0, 2).reshape(3, M)                    # (3, B*T)
    a_t = audio.astype(jnp.bfloat16).transpose(1, 0, 2).reshape(MEL, M)
    x_t = jnp.concatenate([v_t, a_t], axis=0)                        # (Kv+Ka, B*T)

    # --- fused per-timestep pipeline (single pallas_call) ----------------
    fusion_col0 = batfd_fusion_col0(x_t, params)                     # (B*T,) f32
    cls_in = fusion_col0.reshape(B, T)                               # fusion_bm_map[:, 0, :]

    # --- classifier head (tiny; plain XLA per perf review) ---------------
    h = jnp.maximum(cls_in @ params["cls1_w"] + params["cls1_b"], 0.0)
    out = h @ params["cls2_w"] + params["cls2_b"]                    # (B, 1)
    return out


# ----------------------------------------------------------------------------
if __name__ == "__main__":
    # Small shapes consistent with the module's interface.
    B = 2
    T = 64          # temporal_dim (== classifier embed dim)
    C = 32          # v_cla_feature_in == a_cla_feature_in
    D = 8           # max_duration
    MEL = 16        # audio feature bins
    BM_FEATS = (64, 32)
    H = W = 8

    key = jax.random.PRNGKey(0)
    k_v, k_a, k_p = jax.random.split(key, 3)
    video = jax.random.normal(k_v, (B, 3, T, H, W), jnp.float32)
    audio = jax.random.normal(k_a, (B, MEL, T), jnp.float32)

    raw = init_params(k_p, mel=MEL, cla_feat=C, temporal_dim=T,
                      max_duration=D, bm_feats=BM_FEATS)
    params = prepare_params(raw, cla_feat=C)

    fwd = jax.jit(batfd_forward)
    out = jax.block_until_ready(fwd(params, video, audio))
    assert out.shape == (B, 1), out.shape
    assert bool(jnp.all(jnp.isfinite(out)))
    print("KERNEL_OK")
</pallas_src>

<mosaic_0001>
module attributes {stable_mosaic.version = 11 : i64} {
  func.func @_batfd_fused_kernel(%arg0: i32, %arg1: memref<19x128xbf16, #tpu.memory_space<vmem>>, %arg2: memref<64x19xbf16, #tpu.memory_space<vmem>>, %arg3: memref<64x1xf32, #tpu.memory_space<vmem>>, %arg4: memref<128x64xbf16, #tpu.memory_space<vmem>>, %arg5: memref<128x1xf32, #tpu.memory_space<vmem>>, %arg6: memref<64x128xbf16, #tpu.memory_space<vmem>>, %arg7: memref<64x1xf32, #tpu.memory_space<vmem>>, %arg8: memref<8x64xbf16, #tpu.memory_space<vmem>>, %arg9: memref<8x1xf32, #tpu.memory_space<vmem>>, %arg10: memref<8x64xbf16, #tpu.memory_space<vmem>>, %arg11: memref<8x1xf32, #tpu.memory_space<vmem>>, %arg12: memref<1x128xf32, #tpu.memory_space<vmem>>) attributes {dimension_semantics = [#tpu.dimension_semantics<parallel>], iteration_bounds = array<i64: 1>, scalar_prefetch = 0 : i64, scratch_operands = 0 : i64, tpu.core_type = #tpu.core_type<tc>, window_params = [{transform_indices = @transform_0, window_bounds = array<i64: 19, 128>}, {pipeline_mode = #tpu.pipeline_mode<synchronous>, transform_indices = @transform_1, window_bounds = array<i64: 64, 19>}, {pipeline_mode = #tpu.pipeline_mode<synchronous>, transform_indices = @transform_2, window_bounds = array<i64: 64, 1>}, {pipeline_mode = #tpu.pipeline_mode<synchronous>, transform_indices = @transform_3, window_bounds = array<i64: 128, 64>}, {pipeline_mode = #tpu.pipeline_mode<synchronous>, transform_indices = @transform_4, window_bounds = array<i64: 128, 1>}, {pipeline_mode = #tpu.pipeline_mode<synchronous>, transform_indices = @transform_5, window_bounds = array<i64: 64, 128>}, {pipeline_mode = #tpu.pipeline_mode<synchronous>, transform_indices = @transform_6, window_bounds = array<i64: 64, 1>}, {pipeline_mode = #tpu.pipeline_mode<synchronous>, transform_indices = @transform_7, window_bounds = array<i64: 8, 64>}, {pipeline_mode = #tpu.pipeline_mode<synchronous>, transform_indices = @transform_8, window_bounds = array<i64: 8, 1>}, {pipeline_mode = #tpu.pipeline_mode<synchronous>, transform_indices = @transform_9, window_bounds = array<i64: 8, 64>}, {pipeline_mode = #tpu.pipeline_mode<synchronous>, transform_indices = @transform_10, window_bounds = array<i64: 8, 1>}, {transform_indices = @transform_11, window_bounds = array<i64: 1, 128>}]} {
    %c0 = arith.constant 0 : index
    %c0_0 = arith.constant 0 : index
    %0 = vector.load %arg1[%c0, %c0_0] : memref<19x128xbf16, #tpu.memory_space<vmem>>, vector<19x128xbf16>
    %c0_1 = arith.constant 0 : index
    %c0_2 = arith.constant 0 : index
    %1 = vector.load %arg2[%c0_1, %c0_2] : memref<64x19xbf16, #tpu.memory_space<vmem>>, vector<64x19xbf16>
    %cst = arith.constant dense<0.000000e+00> : vector<64x128xf32>
    %2 = tpu.matmul %1, %0, %cst {dimension_numbers = #tpu.dot_dimension_numbers<[1], [0], [0], [1], [0, 0, 1, 1], [], []>} : vector<64x19xbf16>, vector<19x128xbf16>, vector<64x128xf32> -> vector<64x128xf32>
    %c0_3 = arith.constant 0 : index
    %c0_4 = arith.constant 0 : index
    %3 = vector.load %arg3[%c0_3, %c0_4] : memref<64x1xf32, #tpu.memory_space<vmem>>, vector<64x1xf32>
    %4 = vector.broadcast %3 : vector<64x1xf32> to vector<64x128xf32>
    %5 = arith.addf %2, %4 : vector<64x128xf32>
    %cst_5 = arith.constant 0.000000e+00 : f32
    %6 = vector.broadcast %cst_5 : f32 to vector<64x128xf32>
    %7 = arith.maximumf %5, %6 : vector<64x128xf32>
    %8 = arith.truncf %7 : vector<64x128xf32> to vector<64x128xbf16>
    %c0_6 = arith.constant 0 : index
    %c0_7 = arith.constant 0 : index
    %9 = vector.load %arg4[%c0_6, %c0_7] : memref<128x64xbf16, #tpu.memory_space<vmem>>, vector<128x64xbf16>
    %cst_8 = arith.constant dense<0.000000e+00> : vector<128x128xf32>
    %10 = tpu.matmul %9, %8, %cst_8 {dimension_numbers = #tpu.dot_dimension_numbers<[1], [0], [0], [1], [0, 0, 1, 1], [], []>} : vector<128x64xbf16>, vector<64x128xbf16>, vector<128x128xf32> -> vector<128x128xf32>
    %c0_9 = arith.constant 0 : index
    %c0_10 = arith.constant 0 : index
    %11 = vector.load %arg5[%c0_9, %c0_10] : memref<128x1xf32, #tpu.memory_space<vmem>>, vector<128x1xf32>
    %12 = vector.broadcast %11 : vector<128x1xf32> to vector<128x128xf32>
    %13 = arith.addf %10, %12 : vector<128x128xf32>
    %cst_11 = arith.constant 0.000000e+00 : f32
    %14 = vector.broadcast %cst_11 : f32 to vector<128x128xf32>
    %15 = arith.maximumf %13, %14 : vector<128x128xf32>
    %16 = arith.truncf %15 : vector<128x128xf32> to vector<128x128xbf16>
    %c0_12 = arith.constant 0 : index
    %c0_13 = arith.constant 0 : index
    %17 = vector.load %arg6[%c0_12, %c0_13] : memref<64x128xbf16, #tpu.memory_space<vmem>>, vector<64x128xbf16>
    %cst_14 = arith.constant dense<0.000000e+00> : vector<64x128xf32>
    %18 = tpu.matmul %17, %16, %cst_14 {dimension_numbers = #tpu.dot_dimension_numbers<[1], [0], [0], [1], [0, 0, 1, 1], [], []>} : vector<64x128xbf16>, vector<128x128xbf16>, vector<64x128xf32> -> vector<64x128xf32>
    %c0_15 = arith.constant 0 : index
    %c0_16 = arith.constant 0 : index
    %19 = vector.load %arg7[%c0_15, %c0_16] : memref<64x1xf32, #tpu.memory_space<vmem>>, vector<64x1xf32>
    %20 = vector.broadcast %19 : vector<64x1xf32> to vector<64x128xf32>
    %21 = arith.addf %18, %20 : vector<64x128xf32>
    %cst_17 = arith.constant 0.000000e+00 : f32
    %22 = vector.broadcast %cst_17 : f32 to vector<64x128xf32>
    %23 = arith.maximumf %21, %22 : vector<64x128xf32>
    %24 = arith.truncf %23 : vector<64x128xf32> to vector<64x128xbf16>
    %c0_18 = arith.constant 0 : index
    %c0_19 = arith.constant 0 : index
    %25 = vector.load %arg8[%c0_18, %c0_19] : memref<8x64xbf16, #tpu.memory_space<vmem>>, vector<8x64xbf16>
    %cst_20 = arith.constant dense<0.000000e+00> : vector<8x128xf32>
    %26 = tpu.matmul %25, %24, %cst_20 {dimension_numbers = #tpu.dot_dimension_numbers<[1], [0], [0], [1], [0, 0, 1, 1], [], []>} : vector<8x64xbf16>, vector<64x128xbf16>, vector<8x128xf32> -> vector<8x128xf32>
    %c0_21 = arith.constant 0 : index
    %c0_22 = arith.constant 0 : index
    %27 = vector.load %arg9[%c0_21, %c0_22] : memref<8x1xf32, #tpu.memory_space<vmem>>, vector<8x1xf32>
    %28 = vector.broadcast %27 : vector<8x1xf32> to vector<8x128xf32>
    %29 = arith.addf %26, %28 : vector<8x128xf32>
    %30 = arith.negf %29 : vector<8x128xf32>
    %31 = math.exp %30 : vector<8x128xf32>
    %cst_23 = arith.constant 1.000000e+00 : f32
    %32 = vector.broadcast %cst_23 : f32 to vector<8x128xf32>
    %33 = arith.addf %32, %31 : vector<8x128xf32>
    %34 = arith.divf %32, %33 : vector<8x128xf32>
    %c0_24 = arith.constant 0 : index
    %c0_25 = arith.constant 0 : index
    %35 = vector.load %arg10[%c0_24, %c0_25] : memref<8x64xbf16, #tpu.memory_space<vmem>>, vector<8x64xbf16>
    %cst_26 = arith.constant dense<0.000000e+00> : vector<8x128xf32>
    %36 = tpu.matmul %35, %8, %cst_26 {dimension_numbers = #tpu.dot_dimension_numbers<[1], [0], [0], [1], [0, 0, 1, 1], [], []>} : vector<8x64xbf16>, vector<64x128xbf16>, vector<8x128xf32> -> vector<8x128xf32>
    %c0_27 = arith.constant 0 : index
    %c0_28 = arith.constant 0 : index
    %37 = vector.load %arg11[%c0_27, %c0_28] : memref<8x1xf32, #tpu.memory_space<vmem>>, vector<8x1xf32>
    %38 = vector.broadcast %37 : vector<8x1xf32> to vector<8x128xf32>
    %39 = arith.addf %36, %38 : vector<8x128xf32>
    %40 = arith.negf %39 : vector<8x128xf32>
    %41 = math.exp %40 : vector<8x128xf32>
    %cst_29 = arith.constant 1.000000e+00 : f32
    %42 = vector.broadcast %cst_29 : f32 to vector<8x128xf32>
    %43 = arith.addf %42, %41 : vector<8x128xf32>
    %44 = arith.divf %42, %43 : vector<8x128xf32>
    %45 = vector.extract_strided_slice %44 {offsets = [0, 0], sizes = [1, 128], strides = [1, 1]} : vector<8x128xf32> to vector<1x128xf32>
    %46 = vector.extract_strided_slice %34 {offsets = [0, 0], sizes = [1, 128], strides = [1, 1]} : vector<8x128xf32> to vector<1x128xf32>
    %47 = arith.mulf %45, %46 : vector<1x128xf32>
    %cst_30 = arith.constant 1.000000e+00 : f32
    %48 = vector.broadcast %cst_30 : f32 to vector<1x128xf32>
    %49 = arith.subf %48, %45 : vector<1x128xf32>
    %50 = vector.extract_strided_slice %34 {offsets = [1, 0], sizes = [1, 128], strides = [1, 1]} : vector<8x128xf32> to vector<1x128xf32>
    %51 = arith.mulf %49, %50 : vector<1x128xf32>
    %52 = arith.addf %47, %51 : vector<1x128xf32>
    %c0_31 = arith.constant 0 : index
    %c0_32 = arith.constant 0 : index
    %53 = vector.load %arg12[%c0_31, %c0_32] : memref<1x128xf32, #tpu.memory_space<vmem>>, vector<1x128xf32>
    tpu.vector_store %arg12[%c0_31, %c0_32], %52 {strides = array<i32>} : memref<1x128xf32, #tpu.memory_space<vmem>>, vector<1x128xf32>,
    return
  }
  func.func @transform_0(%arg0: i32) -> (i32, i32) {
    %c0_i32 = arith.constant 0 : i32
    %c0_i32_0 = arith.constant 0 : i32
    return %c0_i32, %arg0 : i32, i32
  }
  func.func @transform_1(%arg0: i32) -> (i32, i32) {
    %c0_i32 = arith.constant 0 : i32
    %c0_i32_0 = arith.constant 0 : i32
    %c0_i32_1 = arith.constant 0 : i32
    return %c0_i32, %c0_i32_0 : i32, i32
  }
  func.func @transform_2(%arg0: i32) -> (i32, i32) {
    %c0_i32 = arith.constant 0 : i32
    %c0_i32_0 = arith.constant 0 : i32
    %c0_i32_1 = arith.constant 0 : i32
    return %c0_i32, %c0_i32_0 : i32, i32
  }
  func.func @transform_3(%arg0: i32) -> (i32, i32) {
    %c0_i32 = arith.constant 0 : i32
    %c0_i32_0 = arith.constant 0 : i32
    %c0_i32_1 = arith.constant 0 : i32
    return %c0_i32, %c0_i32_0 : i32, i32
  }
  func.func @transform_4(%arg0: i32) -> (i32, i32) {
    %c0_i32 = arith.constant 0 : i32
    %c0_i32_0 = arith.constant 0 : i32
    %c0_i32_1 = arith.constant 0 : i32
    return %c0_i32, %c0_i32_0 : i32, i32
  }
  func.func @transform_5(%arg0: i32) -> (i32, i32) {
    %c0_i32 = arith.constant 0 : i32
    %c0_i32_0 = arith.constant 0 : i32
    %c0_i32_1 = arith.constant 0 : i32
    return %c0_i32, %c0_i32_0 : i32, i32
  }
  func.func @transform_6(%arg0: i32) -> (i32, i32) {
    %c0_i32 = arith.constant 0 : i32
    %c0_i32_0 = arith.constant 0 : i32
    %c0_i32_1 = arith.constant 0 : i32
    return %c0_i32, %c0_i32_0 : i32, i32
  }
  func.func @transform_7(%arg0: i32) -> (i32, i32) {
    %c0_i32 = arith.constant 0 : i32
    %c0_i32_0 = arith.constant 0 : i32
    %c0_i32_1 = arith.constant 0 : i32
    return %c0_i32, %c0_i32_0 : i32, i32
  }
  func.func @transform_8(%arg0: i32) -> (i32, i32) {
    %c0_i32 = arith.constant 0 : i32
    %c0_i32_0 = arith.constant 0 : i32
    %c0_i32_1 = arith.constant 0 : i32
    return %c0_i32, %c0_i32_0 : i32, i32
  }
  func.func @transform_9(%arg0: i32) -> (i32, i32) {
    %c0_i32 = arith.constant 0 : i32
    %c0_i32_0 = arith.constant 0 : i32
    %c0_i32_1 = arith.constant 0 : i32
    return %c0_i32, %c0_i32_0 : i32, i32
  }
  func.func @transform_10(%arg0: i32) -> (i32, i32) {
    %c0_i32 = arith.constant 0 : i32
    %c0_i32_0 = arith.constant 0 : i32
    %c0_i32_1 = arith.constant 0 : i32
    return %c0_i32, %c0_i32_0 : i32, i32
  }
  func.func @transform_11(%arg0: i32) -> (i32, i32) {
    %c0_i32 = arith.constant 0 : i32
    %c0_i32_0 = arith.constant 0 : i32
    return %c0_i32, %arg0 : i32, i32
  }
}

</mosaic_0001>

<llo_original>
// kernel: squeeze.1
$region0: #{squeeze.1}
  %s0 = inlined_call_operand.vmem [shape: bf16[128], index: 0, kind: input, shape index: {}]
  %s1 = inlined_call_operand.vmem [shape: bf16[2,64], index: 1, kind: output, shape index: {}]
  $region1: #{squeeze.1} parent=0
    #allocation0 [shape = 'u8[4096]{0}', space=vmem, size = 0x1000, scoped, tag = 'scoped mem for output reshape']
    #allocation1 [shape = 'u8[4096]{0}', space=vmem, size = 0x1000, scoped, tag = 'scoped mem for input reshape']
    %s3 = smul.u32 1, 2
    %s4 = sshll.u32 1, %s3
    %s5 = ssub.s32 %s4, 1
    %s6 = sshrl.u32 %s5, 1
    %s7 = sor.u32 %s5, %s6
    %s8 = sand.u32 %s7, 85
    %s9 = sshrl.u32 %s8, 1
    %s10 = sor.u32 %s8, %s9
    %s11 = sand.u32 51, %s10
    %s12 = sshrl.u32 %s11, 2
    %s13 = sor.u32 %s11, %s12
    %s14 = sand.u32 15, %s13
    %v15 = vld [vmem:[%s0] sm:%s14]
    %v16 = vunpack.c.l.bf16 %v15
    %v17 = vunpack.c.h.bf16 %v15
    %18 = vst [vmem:[#allocation1] sm:%s5] %v16
    %v19 = vld [vmem:[#allocation1] sm:$0x1]
    %vm20 = vcmask 523264
    %21 = vst.msk [vmem:[#allocation0] sm:$0x1] %vm20, %v19
    %v22 = vld [vmem:[#allocation1] sm:$0x1]
    %23 = vrot.lane.b32.xlu0 %v22, 64
    %v24 = vpop.permute.xlu0 %23
    %vm25 = vcmask 523264
    %s26 = scalar_lea.vmem [#allocation0], 1
    %27 = vst.msk [vmem:[%s26] sm:$0x1] %vm25, %v24
    %s29 = smul.u32 1, 2
    %s30 = sshll.u32 1, %s29
    %s31 = ssub.s32 %s30, 1
    %s32 = sshrl.u32 %s29, 1
    %v33 = vld [vmem:[#allocation0] sm:%s31]
    %v34 = vpack.c.bf16 0.0, %v33
    %s35 = sshll.u32 1, %s32
    %s36 = ssub.s32 %s35, 1
    %37 = vst [vmem:[%s1] sm:%s36] %v34

// kernel: batfd_forward.1
$region0: #{batfd_forward.1}
  #allocation0 [shape = 'u32[]', space=smem, size = 0x4, offset = 0x4, fixed_abs, tag = 'smem constant byte address 0x4 - core index']
  #allocation1 [shape = 'u32[144,128]{1,0:T(1,128)}', space=vmem, size = 0x12000, scoped, tag = 'internal scratch']
  %s0 = inlined_call_operand.vmem [shape: bf16[19,128], index: 0, kind: input, shape index: {}]
  %s1 = inlined_call_operand.vmem [shape: bf16[64,19], index: 1, kind: input, shape index: {}]
  %s2 = inlined_call_operand.vmem [shape: f32[64,1], index: 2, kind: input, shape index: {}]
  %s3 = inlined_call_operand.vmem [shape: bf16[128,64], index: 3, kind: input, shape index: {}]
  %s4 = inlined_call_operand.vmem [shape: f32[128,1], index: 4, kind: input, shape index: {}]
  %s5 = inlined_call_operand.vmem [shape: bf16[64,128], index: 5, kind: input, shape index: {}]
  %s6 = inlined_call_operand.vmem [shape: f32[64,1], index: 6, kind: input, shape index: {}]
  %s7 = inlined_call_operand.vmem [shape: bf16[8,64], index: 7, kind: input, shape index: {}]
  %s8 = inlined_call_operand.vmem [shape: f32[8,1], index: 8, kind: input, shape index: {}]
  %s9 = inlined_call_operand.vmem [shape: bf16[8,64], index: 9, kind: input, shape index: {}]
  %s10 = inlined_call_operand.vmem [shape: f32[8,1], index: 10, kind: input, shape index: {}]
  %s11 = inlined_call_operand.vmem [shape: f32[1,128], index: 11, kind: output, shape index: {}]
  %s12 = sld [smem:[#allocation0]]
  $region54: #{batfd_forward.1} parent=0
    _
  %s14 = ssub.s32 1, %s12
  %s15 = scalar_select 0, %s14, %s12
  // Predicated region
  $region2: #{batfd_forward.1} parent=0 // pred_check
    _
  $region3: #{batfd_forward.1} parent=0 // pred_check_branch
    %17 = sbr.rel (0) target = $region5
  $region4: #{batfd_forward.1} parent=0 // pred_region
    _
  $region5: #{batfd_forward.1} parent=0 // pred_fallthru
    _
  // Predicated region
  $region6: #{batfd_forward.1} parent=0 // pred_check
    _
  $region7: #{batfd_forward.1} parent=0 // pred_check_branch
    %19 = sbr.rel (0) target = $region9
  $region8: #{batfd_forward.1} parent=0 // pred_region
    _
  $region9: #{batfd_forward.1} parent=0 // pred_fallthru
    _
  // Predicated region
  $region10: #{batfd_forward.1} parent=0 // pred_check
    _
  $region11: #{batfd_forward.1} parent=0 // pred_check_branch
    %21 = sbr.rel (0) target = $region13
  $region12: #{batfd_forward.1} parent=0 // pred_region
    _
  $region13: #{batfd_forward.1} parent=0 // pred_fallthru
    _
  // Predicated region
  $region14: #{batfd_forward.1} parent=0 // pred_check
    _
  $region15: #{batfd_forward.1} parent=0 // pred_check_branch
    %23 = sbr.rel (0) target = $region17
  $region16: #{batfd_forward.1} parent=0 // pred_region
    _
  $region17: #{batfd_forward.1} parent=0 // pred_fallthru
    _
  // Predicated region
  $region18: #{batfd_forward.1} parent=0 // pred_check
    _
  $region19: #{batfd_forward.1} parent=0 // pred_check_branch
    %25 = sbr.rel (0) target = $region21
  $region20: #{batfd_forward.1} parent=0 // pred_region
    _
  $region21: #{batfd_forward.1} parent=0 // pred_fallthru
    _
  // Predicated region
  $region22: #{batfd_forward.1} parent=0 // pred_check
    _
  $region23: #{batfd_forward.1} parent=0 // pred_check_branch
    %27 = sbr.rel (0) target = $region25
  $region24: #{batfd_forward.1} parent=0 // pred_region
    _
  $region25: #{batfd_forward.1} parent=0 // pred_fallthru
    _
  // Predicated region
  $region26: #{batfd_forward.1} parent=0 // pred_check
    _
  $region27: #{batfd_forward.1} parent=0 // pred_check_branch
    %29 = sbr.rel (0) target = $region29
  $region28: #{batfd_forward.1} parent=0 // pred_region
    _
  $region29: #{batfd_forward.1} parent=0 // pred_fallthru
    _
  // Predicated region
  $region30: #{batfd_forward.1} parent=0 // pred_check
    _
  $region31: #{batfd_forward.1} parent=0 // pred_check_branch
    %31 = sbr.rel (0) target = $region33
  $region32: #{batfd_forward.1} parent=0 // pred_region
    _
  $region33: #{batfd_forward.1} parent=0 // pred_fallthru
    _
  // Predicated region
  $region34: #{batfd_forward.1} parent=0 // pred_check
    _
  $region35: #{batfd_forward.1} parent=0 // pred_check_branch
    %33 = sbr.rel (0) target = $region37
  $region36: #{batfd_forward.1} parent=0 // pred_region
    _
  $region37: #{batfd_forward.1} parent=0 // pred_fallthru
    _
  // Predicated region
  $region38: #{batfd_forward.1} parent=0 // pred_check
    _
  $region39: #{batfd_forward.1} parent=0 // pred_check_branch
    %35 = sbr.rel (0) target = $region41
  $region40: #{batfd_forward.1} parent=0 // pred_region
    _
  $region41: #{batfd_forward.1} parent=0 // pred_fallthru
    _
  // Predicated region
  $region42: #{batfd_forward.1} parent=0 // pred_check
    _
  $region43: #{batfd_forward.1} parent=0 // pred_check_branch
    %37 = sbr.rel (0) target = $region45
  $region44: #{batfd_forward.1} parent=0 // pred_region
    _
  $region45: #{batfd_forward.1} parent=0 // pred_fallthru
    _
  %v39 = vld [vmem:[%s0] sm:$0xf]
  %v40 = vld [vmem:[%s0 + $0x4] sm:$0xf]
  %v41 = vld [vmem:[%s0 + $0x8] sm:$0x3]
  %v42 = vld [vmem:[%s1] sm:$0xf]
  %v43 = vld [vmem:[%s1 + $0x4] sm:$0xf]
  %v44 = vld [vmem:[%s1 + $0x8] sm:$0xf]
  %v45 = vld [vmem:[%s1 + $0xc] sm:$0xf]
  %v46 = vld [vmem:[%s1 + $0x10] sm:$0xf]
  %v47 = vld [vmem:[%s1 + $0x14] sm:$0xf]
  %v48 = vld [vmem:[%s1 + $0x18] sm:$0xf]
  %v49 = vld [vmem:[%s1 + $0x1c] sm:$0xf]
  %v50 = vld [vmem:[%s2] sm:$0xff]
  %v51 = vld [vmem:[%s2 + $0x8] sm:$0xff]
  %v52 = vld [vmem:[%s2 + $0x10] sm:$0xff]
  %v53 = vld [vmem:[%s2 + $0x18] sm:$0xff]
  %v54 = vld [vmem:[%s2 + $0x20] sm:$0xff]
  %v55 = vld [vmem:[%s2 + $0x28] sm:$0xff]
  %v56 = vld [vmem:[%s2 + $0x30] sm:$0xff]
  %v57 = vld [vmem:[%s2 + $0x38] sm:$0xff]
  %59 = vset.pattern.permute.xlu0 0
  %60 = vperm.xlu0 %59, %v50
  %v61 = vpop.permute.xlu0 %60
  %64 = vset.pattern.permute.xlu0 0
  %65 = vperm.xlu0 %64, %v51
  %v66 = vpop.permute.xlu0 %65
  %69 = vset.pattern.permute.xlu0 0
  %70 = vperm.xlu0 %69, %v52
  %v71 = vpop.permute.xlu0 %70
  %74 = vset.pattern.permute.xlu0 0
  %75 = vperm.xlu0 %74, %v53
  %v76 = vpop.permute.xlu0 %75
  %79 = vset.pattern.permute.xlu0 0
  %80 = vperm.xlu0 %79, %v54
  %v81 = vpop.permute.xlu0 %80
  %84 = vset.pattern.permute.xlu0 0
  %85 = vperm.xlu0 %84, %v55
  %v86 = vpop.permute.xlu0 %85
  %89 = vset.pattern.permute.xlu0 0
  %90 = vperm.xlu0 %89, %v56
  %v91 = vpop.permute.xlu0 %90
  %94 = vset.pattern.permute.xlu0 0
  %95 = vperm.xlu0 %94, %v57
  %v96 = vpop.permute.xlu0 %95
  %v106 = vunpack.c.l.b16 %v42
  %v107 = vunpack.c.l.b16 %v43
  %v108 = vunpack.c.l.b16 %v44
  %v109 = vunpack.c.l.b16 %v45
  %v110 = vunpack.c.l.b16 %v46
  %v111 = vunpack.c.l.b16 %v47
  %v112 = vunpack.c.l.b16 %v48
  %v113 = vunpack.c.l.b16 %v49
  %v114 = vpack.c.b16 %v107, %v106
  %v115 = vpack.c.b16 %v109, %v108
  %v116 = vpack.c.b16 %v111, %v110
  %v117 = vpack.c.b16 %v113, %v112
  %v121 = vunpack.c.l.b16 %v39
  %v122 = vunpack.c.l.b16 %v40
  %v123 = vunpack.c.l.b16 %v41
  %v124 = vpack.c.b16 %v122, %v121
  %v125 = vpack.c.b16 %v123, %v123
  %vm127 = vcmask 154624
  %v129 = vsel %vm127, %v114, 0
  %v132 = vsel %vm127, %v115, 0
  %v135 = vsel %vm127, %v116, 0
  %v138 = vsel %vm127, %v117, 0
  %vm140 = vcmask 1040384
  %vm141 = vcmask 1041408
  %v142 = vsel %vm140, 4294967295, 65535
  %v143 = vsel %vm141, %v142, 0
  %v145 = vand.u32 %v125, %v143
  %147 = vmatprep.subr.bf16.mxu0 0
  %148 = vmatpush1.bf16.msra.mxu0 0
  %149 = vmatprep.subr.bf16.mxu0 0
  %150 = vmatpush1.bf16.msra.mxu0 0
  %151 = vmatprep.subr.bf16.mxu0 0
  %152 = vmatpush1.bf16.msra.mxu0 0
  %153 = vmatprep.subr.bf16.mxu0 0
  %154 = vmatpush1.bf16.msra.mxu0 0
  %155 = vmatprep.subr.bf16.mxu0 0
  %156 = vmatpush1.bf16.msra.mxu0 0
  %157 = vmatprep.subr.bf16.mxu0 0
  %158 = vmatpush1.bf16.msra.mxu0 0
  %159 = vmatprep.subr.bf16.mxu0 0
  %160 = vmatpush1.bf16.msra.mxu0 %v145
  %161 = vmatprep.subr.bf16.mxu0 0
  %162 = vmatpush1.bf16.msra.mxu0 %v124
  %163 = vmatprep.subr.bf16.mxu0 0
  %164 = vmatpush2.bf16.msra.mxu0 0
  %165 = vmatprep.subr.bf16.mxu0 0
  %166 = vmatpush2.bf16.msra.mxu0 0
  %167 = vmatprep.subr.bf16.mxu0 0
  %168 = vmatpush2.bf16.msra.mxu0 0
  %169 = vmatprep.subr.bf16.mxu0 0
  %170 = vmatpush2.bf16.msra.mxu0 0
  %171 = vmatprep.subr.bf16.mxu0 0
  %172 = vmatpush2.bf16.msra.mxu0 0
  %173 = vmatprep.subr.bf16.mxu0 0
  %174 = vmatpush2.bf16.msra.mxu0 0
  %175 = vmatprep.subr.bf16.mxu0 0
  %176 = vmatpush2.bf16.msra.mxu0 0
  %177 = vmatprep.subr.bf16.mxu0 0
  %178 = vmatpush2.bf16.msra.mxu0 0
  %179 = vmatprep.mubr.bf16.mxu0 0
  %180 = vmatmul.mubr.bf16.gmra.mxu0 %v129
  %v181 = vpop.f32.mrf.mxu0
  %v182 = vadd.f32 %v61, %v181
  %v183 = vpop.f32.mrf.mxu0
  %v184 = vpop.f32.mrf.mxu0
  %v185 = vadd.f32 %v66, %v184
  %v186 = vpop.f32.mrf.mxu0
  %187 = vmatprep.mubr.bf16.mxu0 0
  %188 = vmatmul.mubr.bf16.gmra.mxu0 %v132
  %v189 = vpop.f32.mrf.mxu0
  %v190 = vadd.f32 %v71, %v189
  %v191 = vpop.f32.mrf.mxu0
  %v192 = vpop.f32.mrf.mxu0
  %v193 = vadd.f32 %v76, %v192
  %v194 = vpop.f32.mrf.mxu0
  %195 = vmatprep.mubr.bf16.mxu0 0
  %196 = vmatmul.mubr.bf16.gmra.mxu0 %v135
  %v197 = vpop.f32.mrf.mxu0
  %v198 = vadd.f32 %v81, %v197
  %v199 = vpop.f32.mrf.mxu0
  %v200 = vpop.f32.mrf.mxu0
  %v201 = vadd.f32 %v86, %v200
  %v202 = vpop.f32.mrf.mxu0
  %203 = vmatprep.mubr.bf16.mxu0 0
  %204 = vmatmul.mubr.bf16.gmra.mxu0 %v138
  %v205 = vpop.f32.mrf.mxu0
  %v206 = vadd.f32 %v91, %v205
  %v207 = vpop.f32.mrf.mxu0
  %v208 = vpop.f32.mrf.mxu0
  %v209 = vadd.f32 %v96, %v208
  %v210 = vpop.f32.mrf.mxu0
  %211 = vdwg.mxu0
  %v212 = vmax.f32 %v182, 0.0
  %v213 = vmax.f32 %v185, 0.0
  %v214 = vmax.f32 %v190, 0.0
  %v215 = vmax.f32 %v193, 0.0
  %v216 = vmax.f32 %v198, 0.0
  %v217 = vmax.f32 %v201, 0.0
  %v218 = vmax.f32 %v206, 0.0
  %v219 = vmax.f32 %v209, 0.0
  %v220 = vpack.c.bf16 %v213, %v212
  %v221 = vpack.c.bf16 %v215, %v214
  %v222 = vpack.c.bf16 %v217, %v216
  %v223 = vpack.c.bf16 %v219, %v218
  %v224 = vld [vmem:[%s3] sm:$0xf]
  %v225 = vld [vmem:[%s3 + $0x4] sm:$0xf]
  %v226 = vld [vmem:[%s3 + $0x8] sm:$0xf]
  %v227 = vld [vmem:[%s3 + $0xc] sm:$0xf]
  %v228 = vld [vmem:[%s3 + $0x10] sm:$0xf]
  %v229 = vld [vmem:[%s3 + $0x14] sm:$0xf]
  %v230 = vld [vmem:[%s3 + $0x18] sm:$0xf]
  %v231 = vld [vmem:[%s3 + $0x1c] sm:$0xf]
  %v232 = vld [vmem:[%s3 + $0x20] sm:$0xf]
  %v233 = vld [vmem:[%s3 + $0x24] sm:$0xf]
  %v234 = vld [vmem:[%s3 + $0x28] sm:$0xf]
  %v235 = vld [vmem:[%s3 + $0x2c] sm:$0xf]
  %v236 = vld [vmem:[%s3 + $0x30] sm:$0xf]
  %v237 = vld [vmem:[%s3 + $0x34] sm:$0xf]
  %v238 = vld [vmem:[%s3 + $0x38] sm:$0xf]
  %v239 = vld [vmem:[%s3 + $0x3c] sm:$0xf]
  %v240 = vld [vmem:[%s4] sm:$0xff]
  %v241 = vld [vmem:[%s4 + $0x8] sm:$0xff]
  %v242 = vld [vmem:[%s4 + $0x10] sm:$0xff]
  %v243 = vld [vmem:[%s4 + $0x18] sm:$0xff]
  %v244 = vld [vmem:[%s4 + $0x20] sm:$0xff]
  %v245 = vld [vmem:[%s4 + $0x28] sm:$0xff]
  %v246 = vld [vmem:[%s4 + $0x30] sm:$0xff]
  %v247 = vld [vmem:[%s4 + $0x38] sm:$0xff]
  %v248 = vld [vmem:[%s4 + $0x40] sm:$0xff]
  %v249 = vld [vmem:[%s4 + $0x48] sm:$0xff]
  %v250 = vld [vmem:[%s4 + $0x50] sm:$0xff]
  %v251 = vld [vmem:[%s4 + $0x58] sm:$0xff]
  %v252 = vld [vmem:[%s4 + $0x60] sm:$0xff]
  %v253 = vld [vmem:[%s4 + $0x68] sm:$0xff]
  %v254 = vld [vmem:[%s4 + $0x70] sm:$0xff]
  %v255 = vld [vmem:[%s4 + $0x78] sm:$0xff]
  %257 = vset.pattern.permute.xlu0 0
  %258 = vperm.xlu0 %257, %v240
  %v259 = vpop.permute.xlu0 %258
  %262 = vset.pattern.permute.xlu0 0
  %263 = vperm.xlu0 %262, %v241
  %v264 = vpop.permute.xlu0 %263
  %267 = vset.pattern.permute.xlu0 0
  %268 = vperm.xlu0 %267, %v242
  %v269 = vpop.permute.xlu0 %268
  %272 = vset.pattern.permute.xlu0 0
  %273 = vperm.xlu0 %272, %v243
  %v274 = vpop.permute.xlu0 %273
  %277 = vset.pattern.permute.xlu0 0
  %278 = vperm.xlu0 %277, %v244
  %v279 = vpop.permute.xlu0 %278
  %282 = vset.pattern.permute.xlu0 0
  %283 = vperm.xlu0 %282, %v245
  %v284 = vpop.permute.xlu0 %283
  %287 = vset.pattern.permute.xlu0 0
  %288 = vperm.xlu0 %287, %v246
  %v289 = vpop.permute.xlu0 %288
  %292 = vset.pattern.permute.xlu0 0
  %293 = vperm.xlu0 %292, %v247
  %v294 = vpop.permute.xlu0 %293
  %297 = vset.pattern.permute.xlu0 0
  %298 = vperm.xlu0 %297, %v248
  %v299 = vpop.permute.xlu0 %298
  %302 = vset.pattern.permute.xlu0 0
  %303 = vperm.xlu0 %302, %v249
  %v304 = vpop.permute.xlu0 %303
  %307 = vset.pattern.permute.xlu0 0
  %308 = vperm.xlu0 %307, %v250
  %v309 = vpop.permute.xlu0 %308
  %312 = vset.pattern.permute.xlu0 0
  %313 = vperm.xlu0 %312, %v251
  %v314 = vpop.permute.xlu0 %313
  %317 = vset.pattern.permute.xlu0 0
  %318 = vperm.xlu0 %317, %v252
  %v319 = vpop.permute.xlu0 %318
  %322 = vset.pattern.permute.xlu0 0
  %323 = vperm.xlu0 %322, %v253
  %v324 = vpop.permute.xlu0 %323
  %327 = vset.pattern.permute.xlu0 0
  %328 = vperm.xlu0 %327, %v254
  %v329 = vpop.permute.xlu0 %328
  %332 = vset.pattern.permute.xlu0 0
  %333 = vperm.xlu0 %332, %v255
  %v334 = vpop.permute.xlu0 %333
  %v352 = vunpack.c.l.b16 %v224
  %v353 = vunpack.c.l.b16 %v225
  %v354 = vunpack.c.l.b16 %v226
  %v355 = vunpack.c.l.b16 %v227
  %v356 = vunpack.c.l.b16 %v228
  %v357 = vunpack.c.l.b16 %v229
  %v358 = vunpack.c.l.b16 %v230
  %v359 = vunpack.c.l.b16 %v231
  %v360 = vunpack.c.l.b16 %v232
  %v361 = vunpack.c.l.b16 %v233
  %v362 = vunpack.c.l.b16 %v234
  %v363 = vunpack.c.l.b16 %v235
  %v364 = vunpack.c.l.b16 %v236
  %v365 = vunpack.c.l.b16 %v237
  %v366 = vunpack.c.l.b16 %v238
  %v367 = vunpack.c.l.b16 %v239
  %v368 = vpack.c.b16 %v353, %v352
  %v369 = vpack.c.b16 %v355, %v354
  %v370 = vpack.c.b16 %v357, %v356
  %v371 = vpack.c.b16 %v359, %v358
  %v372 = vpack.c.b16 %v361, %v360
  %v373 = vpack.c.b16 %v363, %v362
  %v374 = vpack.c.b16 %v365, %v364
  %v375 = vpack.c.b16 %v367, %v366
  %vm376 = vcmask 523264
  %v378 = vsel %vm376, %v368, 0
  %v381 = vsel %vm376, %v369, 0
  %v384 = vsel %vm376, %v370, 0
  %v387 = vsel %vm376, %v371, 0
  %v390 = vsel %vm376, %v372, 0
  %v393 = vsel %vm376, %v373, 0
  %v396 = vsel %vm376, %v374, 0
  %v399 = vsel %vm376, %v375, 0
  %401 = vmatprep.subr.bf16.mxu0 0
  %402 = vmatpush1.bf16.msra.mxu0 0
  %403 = vmatprep.subr.bf16.mxu0 0
  %404 = vmatpush1.bf16.msra.mxu0 0
  %405 = vmatprep.subr.bf16.mxu0 0
  %406 = vmatpush1.bf16.msra.mxu0 0
  %407 = vmatprep.subr.bf16.mxu0 0
  %408 = vmatpush1.bf16.msra.mxu0 0
  %409 = vmatprep.subr.bf16.mxu0 0
  %410 = vmatpush1.bf16.msra.mxu0 %v223
  %411 = vmatprep.subr.bf16.mxu0 0
  %412 = vmatpush1.bf16.msra.mxu0 %v222
  %413 = vmatprep.subr.bf16.mxu0 0
  %414 = vmatpush1.bf16.msra.mxu0 %v221
  %415 = vmatprep.subr.bf16.mxu0 0
  %416 = vmatpush1.bf16.msra.mxu0 %v220
  %417 = vmatprep.subr.bf16.mxu0 0
  %418 = vmatpush2.bf16.msra.mxu0 0
  %419 = vmatprep.subr.bf16.mxu0 0
  %420 = vmatpush2.bf16.msra.mxu0 0
  %421 = vmatprep.subr.bf16.mxu0 0
  %422 = vmatpush2.bf16.msra.mxu0 0
  %423 = vmatprep.subr.bf16.mxu0 0
  %424 = vmatpush2.bf16.msra.mxu0 0
  %425 = vmatprep.subr.bf16.mxu0 0
  %426 = vmatpush2.bf16.msra.mxu0 0
  %427 = vmatprep.subr.bf16.mxu0 0
  %428 = vmatpush2.bf16.msra.mxu0 0
  %429 = vmatprep.subr.bf16.mxu0 0
  %430 = vmatpush2.bf16.msra.mxu0 0
  %431 = vmatprep.subr.bf16.mxu0 0
  %432 = vmatpush2.bf16.msra.mxu0 0
  %433 = vmatprep.mubr.bf16.mxu0 0
  %434 = vmatmul.mubr.bf16.gmra.mxu0 %v378
  %v435 = vpop.f32.mrf.mxu0
  %v436 = vadd.f32 %v259, %v435
  %v437 = vpop.f32.mrf.mxu0
  %v438 = vpop.f32.mrf.mxu0
  %v439 = vadd.f32 %v264, %v438
  %v440 = vpop.f32.mrf.mxu0
  %441 = vmatprep.mubr.bf16.mxu0 0
  %442 = vmatmul.mubr.bf16.gmra.mxu0 %v381
  %v443 = vpop.f32.mrf.mxu0
  %v444 = vadd.f32 %v269, %v443
  %v445 = vpop.f32.mrf.mxu0
  %v446 = vpop.f32.mrf.mxu0
  %v447 = vadd.f32 %v274, %v446
  %v448 = vpop.f32.mrf.mxu0
  %449 = vmatprep.mubr.bf16.mxu0 0
  %450 = vmatmul.mubr.bf16.gmra.mxu0 %v384
  %v451 = vpop.f32.mrf.mxu0
  %v452 = vadd.f32 %v279, %v451
  %v453 = vpop.f32.mrf.mxu0
  %v454 = vpop.f32.mrf.mxu0
  %v455 = vadd.f32 %v284, %v454
  %v456 = vpop.f32.mrf.mxu0
  %457 = vmatprep.mubr.bf16.mxu0 0
  %458 = vmatmul.mubr.bf16.gmra.mxu0 %v387
  %v459 = vpop.f32.mrf.mxu0
  %v460 = vadd.f32 %v289, %v459
  %v461 = vpop.f32.mrf.mxu0
  %v462 = vpop.f32.mrf.mxu0
  %v463 = vadd.f32 %v294, %v462
  %v464 = vpop.f32.mrf.mxu0
  %465 = vmatprep.mubr.bf16.mxu0 0
  %466 = vmatmul.mubr.bf16.gmra.mxu0 %v390
  %v467 = vpop.f32.mrf.mxu0
  %v468 = vadd.f32 %v299, %v467
  %v469 = vpop.f32.mrf.mxu0
  %v470 = vpop.f32.mrf.mxu0
  %v471 = vadd.f32 %v304, %v470
  %v472 = vpop.f32.mrf.mxu0
  %473 = vmatprep.mubr.bf16.mxu0 0
  %474 = vmatmul.mubr.bf16.gmra.mxu0 %v393
  %v475 = vpop.f32.mrf.mxu0
  %v476 = vadd.f32 %v309, %v475
  %v477 = vpop.f32.mrf.mxu0
  %v478 = vpop.f32.mrf.mxu0
  %v479 = vadd.f32 %v314, %v478
  %v480 = vpop.f32.mrf.mxu0
  %481 = vmatprep.mubr.bf16.mxu0 0
  %482 = vmatmul.mubr.bf16.gmra.mxu0 %v396
  %v483 = vpop.f32.mrf.mxu0
  %v484 = vadd.f32 %v319, %v483
  %v485 = vpop.f32.mrf.mxu0
  %v486 = vpop.f32.mrf.mxu0
  %v487 = vadd.f32 %v324, %v486
  %v488 = vpop.f32.mrf.mxu0
  %489 = vmatprep.mubr.bf16.mxu0 0
  %490 = vmatmul.mubr.bf16.gmra.mxu0 %v399
  %v491 = vpop.f32.mrf.mxu0
  %v492 = vadd.f32 %v329, %v491
  %v493 = vpop.f32.mrf.mxu0
  %v494 = vpop.f32.mrf.mxu0
  %v495 = vadd.f32 %v334, %v494
  %v496 = vpop.f32.mrf.mxu0
  %497 = vdwg.mxu0
  %v498 = vmax.f32 %v436, 0.0
  %v499 = vmax.f32 %v439, 0.0
  %v500 = vmax.f32 %v444, 0.0
  %v501 = vmax.f32 %v447, 0.0
  %v502 = vmax.f32 %v452, 0.0
  %v503 = vmax.f32 %v455, 0.0
  %v504 = vmax.f32 %v460, 0.0
  %v505 = vmax.f32 %v463, 0.0
  %v506 = vmax.f32 %v468, 0.0
  %v507 = vmax.f32 %v471, 0.0
  %v508 = vmax.f32 %v476, 0.0
  %v509 = vmax.f32 %v479, 0.0
  %v510 = vmax.f32 %v484, 0.0
  %v511 = vmax.f32 %v487, 0.0
  %v512 = vmax.f32 %v492, 0.0
  %v513 = vmax.f32 %v495, 0.0
  %v514 = vpack.c.bf16 %v499, %v498
  %v515 = vpack.c.bf16 %v501, %v500
  %v516 = vpack.c.bf16 %v503, %v502
  %v517 = vpack.c.bf16 %v505, %v504
  %v518 = vpack.c.bf16 %v507, %v506
  %v519 = vpack.c.bf16 %v509, %v508
  %v520 = vpack.c.bf16 %v511, %v510
  %v521 = vpack.c.bf16 %v513, %v512
  %v522 = vld [vmem:[%s5] sm:$0xf]
  %v523 = vld [vmem:[%s5 + $0x4] sm:$0xf]
  %v524 = vld [vmem:[%s5 + $0x8] sm:$0xf]
  %v525 = vld [vmem:[%s5 + $0xc] sm:$0xf]
  %v526 = vld [vmem:[%s5 + $0x10] sm:$0xf]
  %v527 = vld [vmem:[%s5 + $0x14] sm:$0xf]
  %v528 = vld [vmem:[%s5 + $0x18] sm:$0xf]
  %v529 = vld [vmem:[%s5 + $0x1c] sm:$0xf]
  %v530 = vld [vmem:[%s6] sm:$0xff]
  %v531 = vld [vmem:[%s6 + $0x8] sm:$0xff]
  %v532 = vld [vmem:[%s6 + $0x10] sm:$0xff]
  %v533 = vld [vmem:[%s6 + $0x18] sm:$0xff]
  %v534 = vld [vmem:[%s6 + $0x20] sm:$0xff]
  %v535 = vld [vmem:[%s6 + $0x28] sm:$0xff]
  %v536 = vld [vmem:[%s6 + $0x30] sm:$0xff]
  %v537 = vld [vmem:[%s6 + $0x38] sm:$0xff]
  %539 = vset.pattern.permute.xlu0 0
  %540 = vperm.xlu0 %539, %v530
  %v541 = vpop.permute.xlu0 %540
  %544 = vset.pattern.permute.xlu0 0
  %545 = vperm.xlu0 %544, %v531
  %v546 = vpop.permute.xlu0 %545
  %549 = vset.pattern.permute.xlu0 0
  %550 = vperm.xlu0 %549, %v532
  %v551 = vpop.permute.xlu0 %550
  %554 = vset.pattern.permute.xlu0 0
  %555 = vperm.xlu0 %554, %v533
  %v556 = vpop.permute.xlu0 %555
  %559 = vset.pattern.permute.xlu0 0
  %560 = vperm.xlu0 %559, %v534
  %v561 = vpop.permute.xlu0 %560
  %564 = vset.pattern.permute.xlu0 0
  %565 = vperm.xlu0 %564, %v535
  %v566 = vpop.permute.xlu0 %565
  %569 = vset.pattern.permute.xlu0 0
  %570 = vperm.xlu0 %569, %v536
  %v571 = vpop.permute.xlu0 %570
  %574 = vset.pattern.permute.xlu0 0
  %575 = vperm.xlu0 %574, %v537
  %v576 = vpop.permute.xlu0 %575
  %v586 = vunpack.c.l.b16 %v522
  %v587 = vunpack.c.l.b16 %v523
  %v588 = vunpack.c.l.b16 %v524
  %v589 = vunpack.c.l.b16 %v525
  %v590 = vunpack.c.l.b16 %v526
  %v591 = vunpack.c.l.b16 %v527
  %v592 = vunpack.c.l.b16 %v528
  %v593 = vunpack.c.l.b16 %v529
  %v594 = vpack.c.b16 %v587, %v586
  %v595 = vpack.c.b16 %v589, %v588
  %v596 = vpack.c.b16 %v591, %v590
  %v597 = vpack.c.b16 %v593, %v592
  %602 = vmatprep.subr.bf16.mxu0 0
  %603 = vmatpush1.bf16.msra.mxu0 %v521
  %604 = vmatprep.subr.bf16.mxu0 0
  %605 = vmatpush1.bf16.msra.mxu0 %v520
  %606 = vmatprep.subr.bf16.mxu0 0
  %607 = vmatpush1.bf16.msra.mxu0 %v519
  %608 = vmatprep.subr.bf16.mxu0 0
  %609 = vmatpush1.bf16.msra.mxu0 %v518
  %610 = vmatprep.subr.bf16.mxu0 0
  %611 = vmatpush1.bf16.msra.mxu0 %v517
  %612 = vmatprep.subr.bf16.mxu0 0
  %613 = vmatpush1.bf16.msra.mxu0 %v516
  %614 = vmatprep.subr.bf16.mxu0 0
  %615 = vmatpush1.bf16.msra.mxu0 %v515
  %616 = vmatprep.subr.bf16.mxu0 0
  %617 = vmatpush1.bf16.msra.mxu0 %v514
  %618 = vmatprep.subr.bf16.mxu0 0
  %619 = vmatpush2.bf16.msra.mxu0 0
  %620 = vmatprep.subr.bf16.mxu0 0
  %621 = vmatpush2.bf16.msra.mxu0 0
  %622 = vmatprep.subr.bf16.mxu0 0
  %623 = vmatpush2.bf16.msra.mxu0 0
  %624 = vmatprep.subr.bf16.mxu0 0
  %625 = vmatpush2.bf16.msra.mxu0 0
  %626 = vmatprep.subr.bf16.mxu0 0
  %627 = vmatpush2.bf16.msra.mxu0 0
  %628 = vmatprep.subr.bf16.mxu0 0
  %629 = vmatpush2.bf16.msra.mxu0 0
  %630 = vmatprep.subr.bf16.mxu0 0
  %631 = vmatpush2.bf16.msra.mxu0 0
  %632 = vmatprep.subr.bf16.mxu0 0
  %633 = vmatpush2.bf16.msra.mxu0 0
  %634 = vmatprep.mubr.bf16.mxu0 0
  %635 = vmatmul.mubr.bf16.gmra.mxu0 %v594
  %v636 = vpop.f32.mrf.mxu0
  %v637 = vadd.f32 %v541, %v636
  %v638 = vpop.f32.mrf.mxu0
  %v639 = vpop.f32.mrf.mxu0
  %v640 = vadd.f32 %v546, %v639
  %v641 = vpop.f32.mrf.mxu0
  %642 = vmatprep.mubr.bf16.mxu0 0
  %643 = vmatmul.mubr.bf16.gmra.mxu0 %v595
  %v644 = vpop.f32.mrf.mxu0
  %v645 = vadd.f32 %v551, %v644
  %v646 = vpop.f32.mrf.mxu0
  %v647 = vpop.f32.mrf.mxu0
  %v648 = vadd.f32 %v556, %v647
  %v649 = vpop.f32.mrf.mxu0
  %650 = vmatprep.mubr.bf16.mxu0 0
  %651 = vmatmul.mubr.bf16.gmra.mxu0 %v596
  %v652 = vpop.f32.mrf.mxu0
  %v653 = vadd.f32 %v561, %v652
  %v654 = vpop.f32.mrf.mxu0
  %v655 = vpop.f32.mrf.mxu0
  %v656 = vadd.f32 %v566, %v655
  %v657 = vpop.f32.mrf.mxu0
  %658 = vmatprep.mubr.bf16.mxu0 0
  %659 = vmatmul.mubr.bf16.gmra.mxu0 %v597
  %v660 = vpop.f32.mrf.mxu0
  %v661 = vadd.f32 %v571, %v660
  %v662 = vpop.f32.mrf.mxu0
  %v663 = vpop.f32.mrf.mxu0
  %v664 = vadd.f32 %v576, %v663
  %v665 = vpop.f32.mrf.mxu0
  %666 = vdwg.mxu0
  %v667 = vmax.f32 %v637, 0.0
  %v668 = vmax.f32 %v640, 0.0
  %v669 = vmax.f32 %v645, 0.0
  %v670 = vmax.f32 %v648, 0.0
  %v671 = vmax.f32 %v653, 0.0
  %v672 = vmax.f32 %v656, 0.0
  %v673 = vmax.f32 %v661, 0.0
  %v674 = vmax.f32 %v664, 0.0
  %v675 = vpack.c.bf16 %v668, %v667
  %v676 = vpack.c.bf16 %v670, %v669
  %v677 = vpack.c.bf16 %v672, %v671
  %v678 = vpack.c.bf16 %v674, %v673
  %v679 = vld [vmem:[%s7] sm:$0xf]
  %v680 = vld [vmem:[%s8] sm:$0xff]
  %682 = vset.pattern.permute.xlu0 0
  %683 = vperm.xlu0 %682, %v680
  %v684 = vpop.permute.xlu0 %683
  %v687 = vsel %vm376, %v679, 0
  %689 = vmatprep.subr.bf16.mxu0 0
  %690 = vmatpush1.bf16.msra.mxu0 0
  %691 = vmatprep.subr.bf16.mxu0 0
  %692 = vmatpush1.bf16.msra.mxu0 0
  %693 = vmatprep.subr.bf16.mxu0 0
  %694 = vmatpush1.bf16.msra.mxu0 0
  %695 = vmatprep.subr.bf16.mxu0 0
  %696 = vmatpush1.bf16.msra.mxu0 0
  %697 = vmatprep.subr.bf16.mxu0 0
  %698 = vmatpush1.bf16.msra.mxu0 %v678
  %699 = vmatprep.subr.bf16.mxu0 0
  %700 = vmatpush1.bf16.msra.mxu0 %v677
  %701 = vmatprep.subr.bf16.mxu0 0
  %702 = vmatpush1.bf16.msra.mxu0 %v676
  %703 = vmatprep.subr.bf16.mxu0 0
  %704 = vmatpush1.bf16.msra.mxu0 %v675
  %705 = vmatprep.subr.bf16.mxu0 0
  %706 = vmatpush2.bf16.msra.mxu0 0
  %707 = vmatprep.subr.bf16.mxu0 0
  %708 = vmatpush2.bf16.msra.mxu0 0
  %709 = vmatprep.subr.bf16.mxu0 0
  %710 = vmatpush2.bf16.msra.mxu0 0
  %711 = vmatprep.subr.bf16.mxu0 0
  %712 = vmatpush2.bf16.msra.mxu0 0
  %713 = vmatprep.subr.bf16.mxu0 0
  %714 = vmatpush2.bf16.msra.mxu0 0
  %715 = vmatprep.subr.bf16.mxu0 0
  %716 = vmatpush2.bf16.msra.mxu0 0
  %717 = vmatprep.subr.bf16.mxu0 0
  %718 = vmatpush2.bf16.msra.mxu0 0
  %719 = vmatprep.subr.bf16.mxu0 0
  %720 = vmatpush2.bf16.msra.mxu0 0
  %721 = vmatprep.mubr.bf16.mxu0 0
  %722 = vmatmul.mubr.bf16.gmra.mxu0 %v687
  %v723 = vpop.f32.mrf.mxu0
  %v724 = vadd.f32 %v684, %v723
  %v725 = vpop.f32.mrf.mxu0
  %v726 = vpop.f32.mrf.mxu0
  %v727 = vpop.f32.mrf.mxu0
  %728 = vdwg.mxu0
  %v729 = vxor.u32 %v724, 2147483648
  %v730 = vmul.f32 %v729, 1.442695
  %v731 = vpow.pop %v730
  %v732 = vadd.f32 %v731, 1.0
  %v733 = vrcp.pop %v732
  %v734 = vmul.f32 1.0, %v733
  %v735 = vld [vmem:[%s9] sm:$0xf]
  %v736 = vld [vmem:[%s10] sm:$0xff]
  %738 = vset.pattern.permute.xlu0 0
  %739 = vperm.xlu0 %738, %v736
  %v740 = vpop.permute.xlu0 %739
  %v743 = vsel %vm376, %v735, 0
  %745 = vmatprep.subr.bf16.mxu0 0
  %746 = vmatpush1.bf16.msra.mxu0 0
  %747 = vmatprep.subr.bf16.mxu0 0
  %748 = vmatpush1.bf16.msra.mxu0 0
  %749 = vmatprep.subr.bf16.mxu0 0
  %750 = vmatpush1.bf16.msra.mxu0 0
  %751 = vmatprep.subr.bf16.mxu0 0
  %752 = vmatpush1.bf16.msra.mxu0 0
  %753 = vmatprep.subr.bf16.mxu0 0
  %754 = vmatpush1.bf16.msra.mxu0 %v223
  %755 = vmatprep.subr.bf16.mxu0 0
  %756 = vmatpush1.bf16.msra.mxu0 %v222
  %757 = vmatprep.subr.bf16.mxu0 0
  %758 = vmatpush1.bf16.msra.mxu0 %v221
  %759 = vmatprep.subr.bf16.mxu0 0
  %760 = vmatpush1.bf16.msra.mxu0 %v220
  %761 = vmatprep.subr.bf16.mxu0 0
  %762 = vmatpush2.bf16.msra.mxu0 0
  %763 = vmatprep.subr.bf16.mxu0 0
  %764 = vmatpush2.bf16.msra.mxu0 0
  %765 = vmatprep.subr.bf16.mxu0 0
  %766 = vmatpush2.bf16.msra.mxu0 0
  %767 = vmatprep.subr.bf16.mxu0 0
  %768 = vmatpush2.bf16.msra.mxu0 0
  %769 = vmatprep.subr.bf16.mxu0 0
  %770 = vmatpush2.bf16.msra.mxu0 0
  %771 = vmatprep.subr.bf16.mxu0 0
  %772 = vmatpush2.bf16.msra.mxu0 0
  %773 = vmatprep.subr.bf16.mxu0 0
  %774 = vmatpush2.bf16.msra.mxu0 0
  %775 = vmatprep.subr.bf16.mxu0 0
  %776 = vmatpush2.bf16.msra.mxu0 0
  %777 = vmatprep.mubr.bf16.mxu0 0
  %778 = vmatmul.mubr.bf16.gmra.mxu0 %v743
  %v779 = vpop.f32.mrf.mxu0
  %v780 = vadd.f32 %v740, %v779
  %v781 = vpop.f32.mrf.mxu0
  %v782 = vpop.f32.mrf.mxu0
  %v783 = vpop.f32.mrf.mxu0
  %784 = vdwg.mxu0
  %v785 = vxor.u32 %v780, 2147483648
  %v786 = vmul.f32 %v785, 1.442695
  %v787 = vpow.pop %v786
  %v788 = vadd.f32 %v787, 1.0
  %v789 = vrcp.pop %v788
  %v790 = vmul.f32 1.0, %v789
  %v791 = vmul.f32 %v790, %v734
  %v792 = vsub.f32 1.0, %v790
  %v794 = vrot.slane %v734, 1
  %v796 = vmul.f32 %v792, %v794
  %v797 = vadd.f32 %v791, %v796
  %798 = vst [vmem:[%s11] sm:$0x1] %v797
  // Predicated region
  $region46: #{batfd_forward.1} parent=0 // pred_check
    _
  $region47: #{batfd_forward.1} parent=0 // pred_check_branch
    %800 = sbr.rel (0) target = $region49
  $region48: #{batfd_forward.1} parent=0 // pred_region
    _
  $region49: #{batfd_forward.1} parent=0 // pred_fallthru
    _
  // Predicated region
  $region50: #{batfd_forward.1} parent=0 // pred_check
    _
  $region51: #{batfd_forward.1} parent=0 // pred_check_branch
    %802 = sbr.rel (0) target = $region53
  $region52: #{batfd_forward.1} parent=0 // pred_region
    _
  $region53: #{batfd_forward.1} parent=0 // pred_fallthru
    _

</llo_original>
